<compile_context>
chip_gen: v6e
topology: v6e:2x2x1
jax: 0.10.0
libtpu: 0.0.40
codegen_flags: <defaults>
</compile_context>

<pallas_src>
import functools

import jax
import jax.numpy as jnp
from jax import lax
from jax.experimental import pallas as pl
from jax.experimental.pallas import tpu as pltpu


def _round_up(x, m):
    return (x + m - 1) // m * m


def _pick_lane_chunk(s_pad, c):
    """Largest lane chunk (multiple of 128) dividing s_pad with a bounded
    (c, chunk) f32 working set (<= ~16 vregs per chunk)."""
    for cand in (2048, 1024, 512, 256):
        if s_pad % cand == 0 and cand * c <= 16384:
            return cand
    return 128  # s_pad is always a multiple of 128


def _meca_kernel(w_ref, x_ref, o_ref, sum_ref, max_ref, *, s_valid, chunk):
    # w_ref   : SMEM (3,) f32   -- Conv1d(1,1,3,bias=False) weight (scalar prefetch)
    # x_ref   : VMEM (C, S_pad) -- one batch element, resident for the whole body
    # o_ref   : VMEM (C, S_pad)
    # sum_ref : VMEM (C, 1) f32 scratch (running spatial sum)
    # max_ref : VMEM (C, 1) f32 scratch (running spatial max)
    C, s_pad = x_ref.shape
    n_chunks = s_pad // chunk

    sum_ref[...] = jnp.zeros_like(sum_ref)
    max_ref[...] = jnp.full((C, 1), -jnp.inf, dtype=jnp.float32)

    # ---- pass 1: chunked spatial pooling (sum + max) over the lane axis ----
    @pl.loop(0, n_chunks)
    def _pool(j):
        start = pl.multiple_of(j * chunk, chunk)
        blk = x_ref[:, pl.ds(start, chunk)].astype(jnp.float32)      # (C, chunk)
        sum_ref[...] += jnp.sum(blk, axis=-1, keepdims=True)
        if s_valid != s_pad:                 # static: mask the zero-padded tail
            lane = lax.broadcasted_iota(jnp.int32, blk.shape, 1)
            blk = jnp.where(start + lane < s_valid, blk, -jnp.inf)
        max_ref[...] = jnp.maximum(max_ref[...],
                                   jnp.max(blk, axis=-1, keepdims=True))

    # ---- tiny k=3 conv along channels + sigmoid (all on (C,1), sublanes) ----
    # conv is linear and bias-free -> conv(avg) + conv(max) == conv(avg + max)
    pooled = sum_ref[...] * jnp.float32(1.0 / s_valid) + max_ref[...]    # (C, 1)
    sub = lax.broadcasted_iota(jnp.int32, (C, 1), 0)
    prev = jnp.where(sub == 0, 0.0, pltpu.roll(pooled, shift=1, axis=0))
    nxt = jnp.where(sub == C - 1, 0.0, pltpu.roll(pooled, shift=C - 1, axis=0))
    logits = w_ref[0] * prev + w_ref[1] * pooled + w_ref[2] * nxt
    scale = jax.nn.sigmoid(logits).astype(o_ref.dtype)                   # (C, 1)

    # ---- pass 2: rescale in native dtype, lane-dense chunked stores ----
    @pl.loop(0, n_chunks)
    def _rescale(j):
        start = pl.multiple_of(j * chunk, chunk)
        o_ref[:, pl.ds(start, chunk)] = x_ref[:, pl.ds(start, chunk)] * scale


def meca_block(x, conv_weight):
    """x: (b, c, h, w, d); conv_weight: (1, 1, 3) Conv1d weight (no bias)."""
    b, c, h, w, d = x.shape
    s = h * w * d
    s_pad = _round_up(s, 128)            # lane-dense (multiple-of-128) stores
    chunk = _pick_lane_chunk(s_pad, c)

    xf = x.reshape(b, c, s)
    if s_pad != s:
        # zero pad; the pad is masked out of the max and the mean divides by s
        xf = jnp.pad(xf, ((0, 0), (0, 0), (0, s_pad - s)))
    wflat = conv_weight.reshape(3).astype(jnp.float32)

    # Explicit scoped-VMEM budget: double-buffered input + output tiles + slack.
    # TODO(synk): for very large C*S (tile >~ 12 MiB, e.g. big 3-D volumes) switch
    # to a two-pass S-tiled grid (pooling kernel + rescale kernel) instead of
    # growing this limit; that restructure also adds a second parallel grid axis
    # so v7x's two TensorCores stay busy when the batch is small/odd.
    tile_bytes = c * s_pad * x.dtype.itemsize
    vmem_limit = int(min(max(4 * tile_bytes + (2 << 20), 8 << 20), 48 << 20))

    out = pl.pallas_call(
        functools.partial(_meca_kernel, s_valid=s, chunk=chunk),
        out_shape=jax.ShapeDtypeStruct((b, c, s_pad), x.dtype),
        grid_spec=pltpu.PrefetchScalarGridSpec(
            num_scalar_prefetch=1,
            grid=(b,),
            in_specs=[pl.BlockSpec((None, c, s_pad), lambda i, w_ref: (i, 0, 0))],
            out_specs=pl.BlockSpec((None, c, s_pad), lambda i, w_ref: (i, 0, 0)),
            scratch_shapes=[pltpu.VMEM((c, 1), jnp.float32),
                            pltpu.VMEM((c, 1), jnp.float32)],
        ),
        compiler_params=pltpu.CompilerParams(
            dimension_semantics=("parallel",),
            vmem_limit_bytes=vmem_limit,
        ),
    )(wflat, xf)

    if s_pad != s:
        out = out[:, :, :s]
    return out.reshape(b, c, h, w, d)


def meca_block_ref(x, conv_weight):
    """Pure-JAX reference matching the PyTorch semantics."""
    avg = jnp.mean(x, axis=(2, 3, 4))                 # (b, c)
    mx = jnp.max(x, axis=(2, 3, 4))                   # (b, c)
    wk = conv_weight.reshape(3)

    def conv1d_same(v):                               # v: (b, c)
        vp = jnp.pad(v, ((0, 0), (1, 1)))
        return wk[0] * vp[:, :-2] + wk[1] * vp[:, 1:-1] + wk[2] * vp[:, 2:]

    scale = jax.nn.sigmoid(conv1d_same(avg) + conv1d_same(mx))   # (b, c)
    return x * scale[:, :, None, None, None]


if __name__ == "__main__":
    key = jax.random.PRNGKey(0)
    kx, kw = jax.random.split(key)

    # small shapes consistent with the module: (b, c, h, w, d); S = 8*8*4 = 256
    b, c, h, w, d = 2, 8, 8, 8, 4
    x = jax.random.normal(kx, (b, c, h, w, d), dtype=jnp.float32)

    # Conv1d(1, 1, k=3, bias=False) weight, deterministic init
    # (PyTorch default is U(-1/sqrt(fan_in), 1/sqrt(fan_in)), fan_in = 3)
    bound = 1.0 / (3.0 ** 0.5)
    conv_weight = jax.random.uniform(
        kw, (1, 1, 3), minval=-bound, maxval=bound, dtype=jnp.float32
    )

    out = jax.block_until_ready(meca_block(x, conv_weight))

    ref = meca_block_ref(x, conv_weight)
    assert out.shape == x.shape
    assert jnp.allclose(out, ref, atol=1e-5, rtol=1e-5)

    print("KERNEL_OK")
</pallas_src>

<mosaic_0001>
module attributes {stable_mosaic.version = 11 : i64} {
  func.func @_meca_kernel(%arg0: i32, %arg1: memref<3xf32, #tpu.memory_space<smem>>, %arg2: memref<1x8x256xf32, #tpu.memory_space<vmem>>, %arg3: memref<1x8x256xf32, #tpu.memory_space<vmem>>, %arg4: memref<8x1xf32, #tpu.memory_space<vmem>>, %arg5: memref<8x1xf32, #tpu.memory_space<vmem>>) attributes {dimension_semantics = [#tpu.dimension_semantics<parallel>], iteration_bounds = array<i64: 2>, scalar_prefetch = 1 : i64, scratch_operands = 2 : i64, tpu.core_type = #tpu.core_type<tc>, window_params = [{transform_indices = @transform_0, window_bounds = array<i64: 1, 8, 256>}, {transform_indices = @transform_1, window_bounds = array<i64: 1, 8, 256>}]} {
    %cst = arith.constant 0.000000e+00 : f32
    %0 = vector.broadcast %cst : f32 to vector<8x1xf32>
    %c0 = arith.constant 0 : index
    %c0_0 = arith.constant 0 : index
    %1 = vector.load %arg4[%c0, %c0_0] : memref<8x1xf32, #tpu.memory_space<vmem>>, vector<8x1xf32>
    tpu.vector_store %arg4[%c0, %c0_0], %0 {strides = array<i32>} : memref<8x1xf32, #tpu.memory_space<vmem>>, vector<8x1xf32>,
    %cst_1 = arith.constant 0xFF800000 : f32
    %2 = vector.broadcast %cst_1 : f32 to vector<8x1xf32>
    %c0_2 = arith.constant 0 : index
    %c0_3 = arith.constant 0 : index
    %3 = vector.load %arg5[%c0_2, %c0_3] : memref<8x1xf32, #tpu.memory_space<vmem>>, vector<8x1xf32>
    tpu.vector_store %arg5[%c0_2, %c0_3], %2 {strides = array<i32>} : memref<8x1xf32, #tpu.memory_space<vmem>>, vector<8x1xf32>,
    %c0_i32 = arith.constant 0 : i32
    %c1_i32 = arith.constant 1 : i32
    %4 = arith.muli %c0_i32, %c1_i32 : i32
    %c0_i32_4 = arith.constant 0 : i32
    %5 = arith.addi %c0_i32_4, %4 : i32
    %c256_i32 = arith.constant 256 : i32
    %6 = arith.muli %5, %c256_i32 : i32
    %7 = tpu.assume_multiple %6, 256 : i32
    %c0_5 = arith.constant 0 : index
    %c0_6 = arith.constant 0 : index
    %8 = arith.index_cast %7 : i32 to index
    %9 = vector.load %arg2[%c0_5, %c0_6, %8] : memref<1x8x256xf32, #tpu.memory_space<vmem>>, vector<1x8x256xf32>
    %10 = vector.shape_cast %9 : vector<1x8x256xf32> to vector<8x256xf32>
    %c0_7 = arith.constant 0 : index
    %c0_8 = arith.constant 0 : index
    %11 = vector.load %arg4[%c0_7, %c0_8] : memref<8x1xf32, #tpu.memory_space<vmem>>, vector<8x1xf32>
    %cst_9 = arith.constant dense<0.000000e+00> : vector<8xf32>
    %12 = vector.multi_reduction <add>, %10, %cst_9 [1] : vector<8x256xf32> to vector<8xf32>
    %13 = vector.shape_cast %12 : vector<8xf32> to vector<8x1xf32>
    %14 = arith.addf %11, %13 : vector<8x1xf32>
    %c0_10 = arith.constant 0 : index
    %c0_11 = arith.constant 0 : index
    %15 = vector.load %arg4[%c0_10, %c0_11] : memref<8x1xf32, #tpu.memory_space<vmem>>, vector<8x1xf32>
    tpu.vector_store %arg4[%c0_10, %c0_11], %14 {strides = array<i32>} : memref<8x1xf32, #tpu.memory_space<vmem>>, vector<8x1xf32>,
    %c0_12 = arith.constant 0 : index
    %c0_13 = arith.constant 0 : index
    %16 = vector.load %arg5[%c0_12, %c0_13] : memref<8x1xf32, #tpu.memory_space<vmem>>, vector<8x1xf32>
    %cst_14 = arith.constant dense<0xFF800000> : vector<8xf32>
    %17 = vector.multi_reduction <maximumf>, %10, %cst_14 [1] : vector<8x256xf32> to vector<8xf32>
    %18 = vector.shape_cast %17 : vector<8xf32> to vector<8x1xf32>
    %19 = arith.maximumf %16, %18 : vector<8x1xf32>
    %c0_15 = arith.constant 0 : index
    %c0_16 = arith.constant 0 : index
    %20 = vector.load %arg5[%c0_15, %c0_16] : memref<8x1xf32, #tpu.memory_space<vmem>>, vector<8x1xf32>
    tpu.vector_store %arg5[%c0_15, %c0_16], %19 {strides = array<i32>} : memref<8x1xf32, #tpu.memory_space<vmem>>, vector<8x1xf32>,
    %c1_i32_17 = arith.constant 1 : i32
    %c0_18 = arith.constant 0 : index
    %c0_19 = arith.constant 0 : index
    %21 = vector.load %arg4[%c0_18, %c0_19] : memref<8x1xf32, #tpu.memory_space<vmem>>, vector<8x1xf32>
    %cst_20 = arith.constant 3.906250e-03 : f32
    %22 = vector.broadcast %cst_20 : f32 to vector<8x1xf32>
    %23 = arith.mulf %21, %22 : vector<8x1xf32>
    %c0_21 = arith.constant 0 : index
    %c0_22 = arith.constant 0 : index
    %24 = vector.load %arg5[%c0_21, %c0_22] : memref<8x1xf32, #tpu.memory_space<vmem>>, vector<8x1xf32>
    %25 = arith.addf %23, %24 : vector<8x1xf32>
    %26 = tpu.iota {dimensions = array<i32: 0>} : vector<8x1xi32>
    %c0_i32_23 = arith.constant 0 : i32
    %27 = vector.broadcast %c0_i32_23 : i32 to vector<8x1xi32>
    %28 = arith.cmpi eq, %26, %27 : vector<8x1xi32>
    %c1_i32_24 = arith.constant 1 : i32
    %29 = tpu.dynamic_rotate %25 by %c1_i32_24 dim 0 : vector<8x1xf32>, i32 -> vector<8x1xf32>
    %cst_25 = arith.constant 0.000000e+00 : f32
    %30 = vector.broadcast %cst_25 : f32 to vector<8x1xf32>
    %31 = arith.select %28, %30, %29 : vector<8x1xi1>, vector<8x1xf32>
    %c7_i32 = arith.constant 7 : i32
    %32 = vector.broadcast %c7_i32 : i32 to vector<8x1xi32>
    %33 = arith.cmpi eq, %26, %32 : vector<8x1xi32>
    %c7_i32_26 = arith.constant 7 : i32
    %34 = tpu.dynamic_rotate %25 by %c7_i32_26 dim 0 : vector<8x1xf32>, i32 -> vector<8x1xf32>
    %cst_27 = arith.constant 0.000000e+00 : f32
    %35 = vector.broadcast %cst_27 : f32 to vector<8x1xf32>
    %36 = arith.select %33, %35, %34 : vector<8x1xi1>, vector<8x1xf32>
    %c0_28 = arith.constant 0 : index
    %37 = memref.load %arg1[%c0_28] : memref<3xf32, #tpu.memory_space<smem>>
    %38 = vector.broadcast %37 : f32 to vector<8x1xf32>
    %39 = arith.mulf %38, %31 : vector<8x1xf32>
    %c1 = arith.constant 1 : index
    %40 = memref.load %arg1[%c1] : memref<3xf32, #tpu.memory_space<smem>>
    %41 = vector.broadcast %40 : f32 to vector<8x1xf32>
    %42 = arith.mulf %41, %25 : vector<8x1xf32>
    %43 = arith.addf %39, %42 : vector<8x1xf32>
    %c2 = arith.constant 2 : index
    %44 = memref.load %arg1[%c2] : memref<3xf32, #tpu.memory_space<smem>>
    %45 = vector.broadcast %44 : f32 to vector<8x1xf32>
    %46 = arith.mulf %45, %36 : vector<8x1xf32>
    %47 = arith.addf %43, %46 : vector<8x1xf32>
    %48 = arith.negf %47 : vector<8x1xf32>
    %49 = math.exp %48 : vector<8x1xf32>
    %cst_29 = arith.constant 1.000000e+00 : f32
    %50 = vector.broadcast %cst_29 : f32 to vector<8x1xf32>
    %51 = arith.addf %50, %49 : vector<8x1xf32>
    %52 = arith.divf %50, %51 : vector<8x1xf32>
    %c0_i32_30 = arith.constant 0 : i32
    %c1_i32_31 = arith.constant 1 : i32
    %53 = arith.muli %c0_i32_30, %c1_i32_31 : i32
    %c0_i32_32 = arith.constant 0 : i32
    %54 = arith.addi %c0_i32_32, %53 : i32
    %c256_i32_33 = arith.constant 256 : i32
    %55 = arith.muli %54, %c256_i32_33 : i32
    %56 = tpu.assume_multiple %55, 256 : i32
    %c0_34 = arith.constant 0 : index
    %c0_35 = arith.constant 0 : index
    %57 = arith.index_cast %56 : i32 to index
    %58 = vector.load %arg2[%c0_34, %c0_35, %57] : memref<1x8x256xf32, #tpu.memory_space<vmem>>, vector<1x8x256xf32>
    %59 = vector.shape_cast %58 : vector<1x8x256xf32> to vector<8x256xf32>
    %60 = vector.broadcast %52 : vector<8x1xf32> to vector<8x256xf32>
    %61 = arith.mulf %59, %60 : vector<8x256xf32>
    %c0_36 = arith.constant 0 : index
    %c0_37 = arith.constant 0 : index
    %62 = arith.index_cast %56 : i32 to index
    %63 = vector.load %arg3[%c0_36, %c0_37, %62] : memref<1x8x256xf32, #tpu.memory_space<vmem>>, vector<1x8x256xf32>
    %64 = vector.shape_cast %63 : vector<1x8x256xf32> to vector<8x256xf32>
    %65 = vector.shape_cast %61 : vector<8x256xf32> to vector<1x8x256xf32>
    tpu.vector_store %arg3[%c0_36, %c0_37, %62], %65 {strides = array<i32>} : memref<1x8x256xf32, #tpu.memory_space<vmem>>, vector<1x8x256xf32>,
    %c1_i32_38 = arith.constant 1 : i32
    return
  }
  func.func @transform_0(%arg0: i32, %arg1: memref<3xf32, #tpu.memory_space<smem>>) -> (i32, i32, i32) {
    %c0_i32 = arith.constant 0 : i32
    %c0_i32_0 = arith.constant 0 : i32
    %c0_i32_1 = arith.constant 0 : i32
    return %arg0, %c0_i32, %c0_i32_0 : i32, i32, i32
  }
  func.func @transform_1(%arg0: i32, %arg1: memref<3xf32, #tpu.memory_space<smem>>) -> (i32, i32, i32) {
    %c0_i32 = arith.constant 0 : i32
    %c0_i32_0 = arith.constant 0 : i32
    %c0_i32_1 = arith.constant 0 : i32
    return %arg0, %c0_i32, %c0_i32_0 : i32, i32, i32
  }
}

</mosaic_0001>

<llo_original>
// kernel: tpu_custom_call.1
$region0: #{tpu_custom_call.1}
  #allocation0 [shape = 'u32[]', space=smem, size = 0x4, offset = 0x4, fixed_abs, tag = 'smem constant byte address 0x4 - core index']
  #allocation1 [shape = 'u32[144,128]{1,0:T(1,128)}', space=vmem, size = 0x12000, scoped, tag = 'internal scratch']
  #allocation2 [shape = 'f32[8,1]{1,0:T(8,128)}', space=vmem, size = 0x1000, scoped, tag = 'scratch operand']
  #allocation3 [shape = 'f32[8,1]{1,0:T(8,128)}', space=vmem, size = 0x1000, scoped, tag = 'scratch operand']
  #allocation4 [shape = 's32[1]{0}', space=sflag, size = 0x4, scoped, tag = 'scoped memory for tpu_custom_call.1']
  #allocation5 [shape = 'u8[512]{0}', space=smem, size = 0x200, scoped, tag = 'prefetched SMEM operand 0']
  %s0 = inlined_call_operand.hbm [shape: f32[3], index: 0, kind: input, shape index: {}]
  %s1 = inlined_call_operand.hbm [shape: f32[2,8,256], index: 1, kind: input, shape index: {}]
  %s2 = inlined_call_operand.hbm [shape: f32[2,8,256], index: 2, kind: output, shape index: {}]
  %s3 = sld [smem:[#allocation0]]
  $region41: #{tpu_custom_call.1} parent=0
    _
  %s5 = ssub.s32 1, %s3
  %s6 = scalar_select 0, %s5, %s3
  %8 = dma.hbm_to_smem %s0, 16, [#allocation5], [#allocation4]
  %9 = dma.done [#allocation4], 16
  %10 = sfence
  $region1: #{tpu_custom_call.1} parent=0
    #allocation6 [shape = 'u8[16384]{0}', space=vmem, size = 0x4000, scoped, tag = 'input window, operand 1']
    #allocation7 [shape = 's32[2]{0}', space=sflag, size = 0x8, scoped, tag = 'scoped memory for tpu_custom_call.1']
    #allocation8 [shape = 's32[2]{0}', space=sflag, size = 0x8, scoped, tag = 'scoped memory for tpu_custom_call.1']
    #allocation9 [shape = 'u8[16384]{0}', space=vmem, size = 0x4000, scoped, tag = 'output window, operand 0']
    %11 = vsyncpa [#allocation7], 0
    %s12 = scalar_lea.sflag [#allocation7], 1
    %13 = vsyncpa %s12, 0
    %14 = vsyncpa [#allocation8], 0
    %s15 = scalar_lea.sflag [#allocation8], 1
    %16 = vsyncpa %s15, 0
    loop: start=0, step=1, limit=4
    $region2: #{tpu_custom_call.1} parent=1 // loop_pre_header
      _
    $region3: #{tpu_custom_call.1} parent=1 // loop_header
      %s18 = sphi 0, %s22
      %p19 = scmp.ge.s32.totalorder %s18, 4
      %s28 = sphi 0, %s30
      %s31 = sphi 0, %s28
      %s32 = sphi 0, %s31
      %s48 = sphi 0, %s32
      %s54 = sphi 0, %s56
      %s57 = sphi 0, %s54
      %s58 = sphi 0, %s57
      %s74 = sphi 0, %s58
    $region4: #{tpu_custom_call.1} parent=1 // loop_header_branch
      %21 = sbr.rel (%p19) target = $region8
    $region5: #{tpu_custom_call.1} parent=1 // loop_body
      %s23 = ssub.s32 %s18, 1
      %s24 = ssub.s32 %s18, 2
      %s25 = sadd.s32 %s18, 1
      %s26 = ssub.s32 %s18, %s25
      %p27 = scmp.eq.s32.totalorder %s26, 0
      %s29 = sadd.s32 %s28, 1
      %s30 = scalar_select %p27, %s28, %s29
      %p33 = pneg %p27
      %p34 = scmp.eq.s32.totalorder %s18, 1
      %p35 = por %p33, %p34
      %p36 = scmp.ne.s32.totalorder %s28, %s31
      %p37 = scmp.eq.s32.totalorder %s18, 0
      %p38 = por %p36, %p37
      %p39 = scmp.ne.s32.totalorder %s28, %s31
      %p40 = scmp.eq.s32.totalorder %s23, 1
      %p41 = por %p39, %p40
      %p42 = scmp.ne.s32.totalorder %s31, %s32
      %p43 = scmp.eq.s32.totalorder %s23, 0
      %p44 = por %p42, %p43
      %p45 = scmp.ne.s32.totalorder %s31, %s32
      %p46 = scmp.eq.s32.totalorder %s24, 1
      %p47 = por %p45, %p46
      %p49 = scmp.ne.s32.totalorder %s32, %s48
      %p50 = scmp.eq.s32.totalorder %s24, 0
      %p51 = por %p49, %p50
      %s52 = ssub.s32 %s18, %s25
      %p53 = scmp.eq.s32.totalorder %s52, 0
      %s55 = sadd.s32 %s54, 1
      %s56 = scalar_select %p53, %s54, %s55
      %p59 = pneg %p53
      %p60 = scmp.eq.s32.totalorder %s18, 1
      %p61 = por %p59, %p60
      %p62 = scmp.ne.s32.totalorder %s54, %s57
      %p63 = scmp.eq.s32.totalorder %s18, 0
      %p64 = por %p62, %p63
      %p65 = scmp.ne.s32.totalorder %s54, %s57
      %p66 = scmp.eq.s32.totalorder %s23, 1
      %p67 = por %p65, %p66
      %p68 = scmp.ne.s32.totalorder %s57, %s58
      %p69 = scmp.eq.s32.totalorder %s23, 0
      %p70 = por %p68, %p69
      %p71 = scmp.ne.s32.totalorder %s57, %s58
      %p72 = scmp.eq.s32.totalorder %s24, 1
      %p73 = por %p71, %p72
      %p75 = scmp.ne.s32.totalorder %s58, %s74
      %p76 = scmp.eq.s32.totalorder %s24, 0
      %p77 = por %p75, %p76
      %p78 = scmp.le.s32.totalorder 1, %s18
      %p79 = scmp.lt.s32.totalorder %s18, 3
      %p80 = pnand %p78, %p79
      %p81 = pneg %p80
      // Predicated region
      $region9: #{tpu_custom_call.1} parent=5 // pred_check
        _
      $region10: #{tpu_custom_call.1} parent=5 // pred_check_branch
        %83 = sbr.rel (%p80) target = $region12
      $region11: #{tpu_custom_call.1} parent=5 // pred_region
        %s84 = ssub.s32 %s18, 1
      $region12: #{tpu_custom_call.1} parent=5 // pred_fallthru
        _
      %p85 = scmp.lt.s32.totalorder %s18, 2
      // Predicated region
      $region13: #{tpu_custom_call.1} parent=5 // pred_check
        %p86 = pneg %p85
      $region14: #{tpu_custom_call.1} parent=5 // pred_check_branch
        %88 = sbr.rel (%p86) target = $region16
      $region15: #{tpu_custom_call.1} parent=5 // pred_region
        // Predicated region
        $region17: #{tpu_custom_call.1} parent=15 // pred_check
          %p89 = pneg %p38
        $region18: #{tpu_custom_call.1} parent=15 // pred_check_branch
          %91 = sbr.rel (%p89) target = $region20
        $region19: #{tpu_custom_call.1} parent=15 // pred_region
          %s92 = sand.u32 %s28, 1
          %s93 = scalar_lea.sflag [#allocation7], %s92
          %s94 = sand.u32 %s28, 1
          %s95 = smul.addr %s94, 16
          %s96 = scalar_lea.vmem [#allocation6], %s95
          %s98 = ssub.s32 256, 256
          %99 = vsyncadd %s93, %s98
          %s100 = smul.addr %s18, 2
          %s101 = smul.addr %s100, 128
          %s102 = scalar_lea.hbm %s1, %s101
          %s104 = sshll.u32 %s96, 4
          %s105 = int_to_ptr.vmem [resolvable:$true] %s104
          %107 = dma.hbm_to_vmem [thread:$0]  %s102, 256, %s105, %s93
        $region20: #{tpu_custom_call.1} parent=15 // pred_fallthru
          _
      $region16: #{tpu_custom_call.1} parent=5 // pred_fallthru
        _
      %p108 = scmp.le.s32.totalorder 1, %s18
      %p109 = scmp.lt.s32.totalorder %s18, 3
      %p110 = pnand %p108, %p109
      %p111 = pneg %p110
      // Predicated region
      $region21: #{tpu_custom_call.1} parent=5 // pred_check
        _
      $region22: #{tpu_custom_call.1} parent=5 // pred_check_branch
        %113 = sbr.rel (%p110) target = $region24
      $region23: #{tpu_custom_call.1} parent=5 // pred_region
        %s114 = ssub.s32 %s18, 1
        %s115 = sand.u32 %s31, 1
        %s116 = scalar_lea.sflag [#allocation7], %s115
        %s117 = sand.u32 %s31, 1
        %s118 = smul.addr %s117, 16
        %s119 = scalar_lea.vmem [#allocation6], %s118
        // Predicated region
        $region25: #{tpu_custom_call.1} parent=23 // pred_check
          %p120 = pneg %p44
        $region26: #{tpu_custom_call.1} parent=23 // pred_check_branch
          %122 = sbr.rel (%p120) target = $region28
        $region27: #{tpu_custom_call.1} parent=23 // pred_region
          %123 = dma.done %s116, 256
        $region28: #{tpu_custom_call.1} parent=23 // pred_fallthru
          _
        %s124 = sand.u32 %s31, 1
        %s125 = scalar_lea.sflag [#allocation7], %s124
        %s126 = sand.u32 %s31, 1
        %s127 = smul.addr %s126, 16
        %s128 = scalar_lea.vmem [#allocation6], %s127
        %p129 = pneg %p44
        %p130 = pneg %p41
        %p131 = pneg %p70
        %p132 = pneg %p67
        %s133 = sand.u32 %s57, 1
        %s134 = scalar_lea.sflag [#allocation8], %s133
        %s135 = sand.u32 %s57, 1
        %s136 = smul.addr %s135, 16
        %s137 = scalar_lea.vmem [#allocation9], %s136
        %vm138 = vcmask 7168
        %139 = vst.msk [vmem:[#allocation2] sm:$0xff] %vm138, 0.0
        %140 = vst.msk [vmem:[#allocation3] sm:$0xff] %vm138, -inf
        %v141 = vld [vmem:[%s119] sm:$0xff]
        %v142 = vld [vmem:[%s119 + $0x8] sm:$0xff]
        %v143 = vld [vmem:[#allocation2] sm:$0xff]
        %v144 = vadd.f32 %v141, %v142
        %145 = vadd.xlane.f32.xlu0 %v144
        %v146 = vpop.xlane.xlu0 %145
        %v147 = vadd.f32 %v143, %v146
        %148 = vst.msk [vmem:[#allocation2] sm:$0xff] %vm138, %v147
        %v149 = vld [vmem:[#allocation3] sm:$0xff]
        %v150 = vmax.f32 %v141, %v142
        %151 = vmax.xlane.f32.xlu0 %v150
        %v152 = vpop.xlane.xlu0 %151
        %v153 = vmax.f32 %v149, %v152
        %154 = vst.msk [vmem:[#allocation3] sm:$0xff] %vm138, %v153
        %v155 = vld [vmem:[#allocation2] sm:$0xff]
        %v156 = vmul.f32 %v155, 0.00390625
        %v157 = vld [vmem:[#allocation3] sm:$0xff]
        %v158 = vadd.f32 %v156, %v157
        %v159 = vlaneseq
        %v160 = vshrl.u32 %v159, 7
        %vm161 = vcmp.eq.s32.totalorder %v160, 0
        %v162 = vrot.slane %v158, 7
        %v163 = vsel %vm161, 0.0, %v162
        %vm164 = vcmp.eq.s32.totalorder %v160, 7
        %v165 = vrot.slane %v158, 1
        %v166 = vsel %vm164, 0.0, %v165
        %s167 = sld [smem:[#allocation5]]
        %v168 = vstv %s167
        %v169 = vmul.f32 %v168, %v163
        %s170 = sld [smem:[#allocation5 + $0x1]]
        %v171 = vstv %s170
        %v172 = vmul.f32 %v171, %v158
        %v173 = vadd.f32 %v169, %v172
        %s174 = sld [smem:[#allocation5 + $0x2]]
        %v175 = vstv %s174
        %v176 = vmul.f32 %v175, %v166
        %v177 = vadd.f32 %v173, %v176
        %v178 = vxor.u32 %v177, 2147483648
        %v179 = vmul.f32 %v178, 1.442695
        %v180 = vpow.pop %v179
        %v181 = vadd.f32 %v180, 1.0
        %v182 = vrcp.pop %v181
        %v183 = vmul.f32 1.0, %v182
        %v184 = vld [vmem:[%s119] sm:$0xff]
        %v185 = vld [vmem:[%s119 + $0x8] sm:$0xff]
        %187 = vset.pattern.permute.xlu0 0
        %188 = vperm.xlu0 %187, %v183
        %v189 = vpop.permute.xlu0 %188
        %v191 = vmul.f32 %v184, %v189
        %v192 = vmul.f32 %v185, %v189
        %193 = vst [vmem:[%s137] sm:$0xff] %v191
        %194 = vst [vmem:[%s137 + $0x8] sm:$0xff] %v192
        %s195 = sand.u32 %s57, 1
        %s196 = scalar_lea.sflag [#allocation8], %s195
        %s197 = sand.u32 %s57, 1
        %s198 = smul.addr %s197, 16
        %s199 = scalar_lea.vmem [#allocation9], %s198
        // Predicated region
        $region29: #{tpu_custom_call.1} parent=23 // pred_check
          %p200 = pneg %p67
        $region30: #{tpu_custom_call.1} parent=23 // pred_check_branch
          %202 = sbr.rel (%p200) target = $region32
        $region31: #{tpu_custom_call.1} parent=23 // pred_region
          %s204 = ssub.s32 256, 256
          %205 = vsyncadd %s196, %s204
          %s206 = smul.addr %s23, 2
          %s207 = smul.addr %s206, 128
          %s208 = scalar_lea.hbm %s2, %s207
          %s210 = sshll.u32 %s199, 4
          %s211 = int_to_ptr.vmem [resolvable:$true] %s210
          %213 = dma.vmem_to_hbm [thread:$0]  %s211, 256, %s208, %s196
        $region32: #{tpu_custom_call.1} parent=23 // pred_fallthru
          _
      $region24: #{tpu_custom_call.1} parent=5 // pred_fallthru
        _
      %p214 = scmp.le.s32.totalorder 2, %s18
      // Predicated region
      $region33: #{tpu_custom_call.1} parent=5 // pred_check
        %p215 = pneg %p214
      $region34: #{tpu_custom_call.1} parent=5 // pred_check_branch
        %217 = sbr.rel (%p215) target = $region36
      $region35: #{tpu_custom_call.1} parent=5 // pred_region
        %s218 = ssub.s32 %s18, 2
        // Predicated region
        $region37: #{tpu_custom_call.1} parent=35 // pred_check
          %p219 = pneg %p73
        $region38: #{tpu_custom_call.1} parent=35 // pred_check_branch
          %221 = sbr.rel (%p219) target = $region40
        $region39: #{tpu_custom_call.1} parent=35 // pred_region
          %s222 = sand.u32 %s58, 1
          %s223 = scalar_lea.sflag [#allocation8], %s222
          %s224 = sand.u32 %s58, 1
          %s225 = smul.addr %s224, 16
          %s226 = scalar_lea.vmem [#allocation9], %s225
          %227 = dma.done %s223, 256
        $region40: #{tpu_custom_call.1} parent=35 // pred_fallthru
          _
      $region36: #{tpu_custom_call.1} parent=5 // pred_fallthru
        _
    $region6: #{tpu_custom_call.1} parent=1 // loop_footer
      %s22 = sadd.s32 1, %s18
    $region7: #{tpu_custom_call.1} parent=1 // loop_footer_branch
      %17 = sbr.rel target = $region3
    $region8: #{tpu_custom_call.1} parent=1 // loop_exit
      _
    %228 = vsyncpa [#allocation7], 1
    %s229 = scalar_lea.sflag [#allocation7], 1
    %230 = vsyncpa %s229, 1
    %231 = vsyncpa [#allocation8], 1
    %s232 = scalar_lea.sflag [#allocation8], 1
    %233 = vsyncpa %s232, 1

</llo_original>
